<compile_context>
chip_gen: v7x
topology: tpu7x:2x2x1
jax: 0.10.0
libtpu: 0.0.40
codegen_flags: <defaults>
</compile_context>

<pallas_src>
import jax
import jax.numpy as jnp
from jax.experimental import pallas as pl
from jax.experimental.pallas import tpu as pltpu

BN_EPS = 1e-5
LANE = 128


def _round_up(n, m):
    return ((n + m - 1) // m) * m


def _pad2d(a, rows, cols):
    r, c = a.shape
    return jnp.pad(a, ((0, rows - r), (0, cols - c)))


def _make_fused_mlp_kernel(num_hidden, batch_size):
    """Fused kernel: num_hidden x [Linear -> BN(train) -> ReLU] + final Linear.

    Refs:
      x_ref : (B, P)        bf16   lane-padded input activations
      w_ref : (L+1, P, P)   bf16   stacked weight matrices (hidden..., final)
      v_ref : (2L+1, P)     f32    rows = [g0, b0, g1, b1, ..., b_final]
      o_ref : (B, P)        f32    lane-padded output
    """
    inv_b = 1.0 / float(batch_size)

    def kernel(x_ref, w_ref, v_ref, out_ref):
        h = x_ref[...]                       # (B, P) bf16, stays in VMEM/vregs
        v = v_ref[...]                       # (2L+1, P) f32, loaded once
        for l in range(num_hidden):
            # bf16 MXU matmul, f32 accumulate.  Hidden Linear bias is folded
            # away: training-mode BN mean subtraction cancels it exactly.
            z = jnp.dot(h, w_ref[l], preferred_element_type=jnp.float32)
            # Parallel moment reductions: sum(z) and sum(z*z) are independent,
            # so the two reduces + the z*z pass can co-issue.
            s1 = jnp.sum(z, axis=0, keepdims=True)
            s2 = jnp.sum(z * z, axis=0, keepdims=True)
            mean = s1 * inv_b
            var = jnp.maximum(s2 * inv_b - mean * mean, 0.0)  # clamp fp cancellation
            gamma = v[2 * l:2 * l + 1]
            beta = v[2 * l + 1:2 * l + 2]
            scale = gamma * jax.lax.rsqrt(var + BN_EPS)
            # affine + ReLU + bf16 downcast fused into one elementwise pass.
            h = jnp.maximum((z - mean) * scale + beta, 0.0).astype(jnp.bfloat16)
        # Final plain Linear (bias kept, no BN / ReLU).
        b_final = v[2 * num_hidden:2 * num_hidden + 1]
        z = jnp.dot(h, w_ref[num_hidden], preferred_element_type=jnp.float32) + b_final
        out_ref[...] = z.astype(out_ref.dtype)

    return kernel


def init_params(key, input_size, hidden_sizes, output_size):
    """Deterministic synthetic parameters matching the nn.Module's shapes.

    Each hidden block: Linear(in, h) + BatchNorm1d(h); final: Linear(h_last, out).
    Linear init: uniform(-1/sqrt(fan_in), 1/sqrt(fan_in)) like PyTorch.
    BN gamma=1, beta=0 (PyTorch defaults). Weights stored as (in, out).
    """
    params = []
    sizes = [input_size] + list(hidden_sizes)
    for i in range(len(hidden_sizes)):
        fan_in, fan_out = sizes[i], sizes[i + 1]
        key, kw, kb = jax.random.split(key, 3)
        bound = 1.0 / jnp.sqrt(fan_in)
        w = jax.random.uniform(kw, (fan_in, fan_out), jnp.float32, -bound, bound)
        b = jax.random.uniform(kb, (1, fan_out), jnp.float32, -bound, bound)
        gamma = jnp.ones((1, fan_out), jnp.float32)
        beta = jnp.zeros((1, fan_out), jnp.float32)
        params.append(("hidden", w, b, gamma, beta))
    fan_in = hidden_sizes[-1]
    key, kw, kb = jax.random.split(key, 3)
    bound = 1.0 / jnp.sqrt(fan_in)
    w = jax.random.uniform(kw, (fan_in, output_size), jnp.float32, -bound, bound)
    b = jax.random.uniform(kb, (1, output_size), jnp.float32, -bound, bound)
    params.append(("final", w, b))
    return params


def ped_neural_network_forward(x, params, output_size):
    """Forward pass equivalent to PedNeuralNetwork.forward (training-mode BN),
    executed as ONE fused Pallas kernel with exactly three VMEM inputs."""
    B, in_dim = x.shape
    hidden = [l for l in params if l[0] == "hidden"]
    final = [l for l in params if l[0] == "final"][0]
    num_hidden = len(hidden)

    # One common lane-padded feature width so every weight stacks into a
    # single (L+1, P, P) array.  Zero padding is exact (see header comment).
    dims = [in_dim] + [w.shape[1] for (_, w, _b, _g, _bt) in hidden] + [final[1].shape[1]]
    P = max(_round_up(d, LANE) for d in dims)

    # (1) activations: bf16, padded once in the wrapper.
    x_p = _pad2d(x.astype(jnp.bfloat16), B, P)

    # (2) all weights stacked -> single HBM->VMEM DMA. Hidden biases dropped
    #     (folded away, exact under training-mode BN).
    w_list = [_pad2d(w, P, P) for (_, w, _b, _g, _bt) in hidden]
    w_list.append(_pad2d(final[1], P, P))
    w_stack = jnp.stack(w_list).astype(jnp.bfloat16)

    # (3) all per-feature vectors packed: [g0, b0, g1, b1, ..., b_final].
    v_rows = []
    for (_, _w, _b, g, bt) in hidden:
        v_rows.append(_pad2d(g, 1, P))
        v_rows.append(_pad2d(bt, 1, P))
    v_rows.append(_pad2d(final[2], 1, P))
    v_stack = jnp.concatenate(v_rows, axis=0).astype(jnp.float32)

    kernel = _make_fused_mlp_kernel(num_hidden, B)

    cost = pl.CostEstimate(
        flops=2 * B * P * P * (num_hidden + 1),
        transcendentals=num_hidden * P,
        bytes_accessed=int(x_p.size * 2 + w_stack.size * 2 + v_stack.size * 4 + B * P * 4),
    )

    # TODO(synk): for production batch sizes, add a grid over B (tile ~512-1024
    # rows, half that on v7x's 64 MiB VMEM), mark the batch axis "parallel" to
    # engage v7x's second TensorCore, and switch BN to two-pass exact-count
    # sum/sum-of-squares accumulators so B padding/tiling never corrupts the
    # batch statistics.  Whole-batch residency is fine at these shapes (<1 MiB).
    out_padded = pl.pallas_call(
        kernel,
        out_shape=jax.ShapeDtypeStruct((B, P), jnp.float32),
        in_specs=[pl.BlockSpec(memory_space=pltpu.MemorySpace.VMEM)] * 3,
        out_specs=pl.BlockSpec(memory_space=pltpu.MemorySpace.VMEM),
        cost_estimate=cost,
    )(x_p, w_stack, v_stack)
    return out_padded[:, :output_size]


def _reference_forward(x, params):
    """Pure-JAX reference with matching numerics (bf16 matmul inputs, f32
    accumulation/elementwise; PyTorch hidden bias kept — it cancels exactly
    under training-mode BN, so it matches the bias-folded kernel to ~f32 eps)."""
    h = x.astype(jnp.float32)
    for layer in params:
        if layer[0] == "hidden":
            _, w, b, gamma, beta = layer
            z = jnp.dot(
                h.astype(jnp.bfloat16),
                w.astype(jnp.bfloat16),
                preferred_element_type=jnp.float32,
            ) + b
            mean = jnp.mean(z, axis=0, keepdims=True)
            var = jnp.mean((z - mean) ** 2, axis=0, keepdims=True)
            zn = (z - mean) * jax.lax.rsqrt(var + BN_EPS)
            h = jnp.maximum(gamma * zn + beta, 0.0)
        else:
            _, w, b = layer
            h = jnp.dot(
                h.astype(jnp.bfloat16),
                w.astype(jnp.bfloat16),
                preferred_element_type=jnp.float32,
            ) + b
    return h


if __name__ == "__main__":
    key = jax.random.PRNGKey(0)
    batch = 8
    input_size = 16
    hidden_sizes = [32, 32]
    output_size = 4

    k_x, k_p = jax.random.split(key)
    x = jax.random.normal(k_x, (batch, input_size), jnp.float32)
    params = init_params(k_p, input_size, hidden_sizes, output_size)

    out = ped_neural_network_forward(x, params, output_size)
    out = jax.block_until_ready(out)

    ref = _reference_forward(x, params)
    assert out.shape == (batch, output_size)
    assert jnp.allclose(out, ref, atol=1e-3, rtol=1e-3), (
        f"max abs err = {jnp.max(jnp.abs(out - ref))}"
    )

    print("KERNEL_OK")
</pallas_src>

<mosaic_0001>
module attributes {stable_mosaic.version = 11 : i64} {
  func.func @kernel(%arg0: memref<8x128xbf16, #tpu.memory_space<vmem>>, %arg1: memref<3x128x128xbf16, #tpu.memory_space<vmem>>, %arg2: memref<5x128xf32, #tpu.memory_space<vmem>>, %arg3: memref<8x128xf32, #tpu.memory_space<vmem>>) attributes {dimension_semantics = [], scalar_prefetch = 0 : i64, scratch_operands = 0 : i64, tpu.core_type = #tpu.core_type<tc>} {
    %c0 = arith.constant 0 : index
    %c0_0 = arith.constant 0 : index
    %0 = vector.load %arg0[%c0, %c0_0] : memref<8x128xbf16, #tpu.memory_space<vmem>>, vector<8x128xbf16>
    %c0_1 = arith.constant 0 : index
    %c0_2 = arith.constant 0 : index
    %1 = vector.load %arg2[%c0_1, %c0_2] : memref<5x128xf32, #tpu.memory_space<vmem>>, vector<5x128xf32>
    %c0_3 = arith.constant 0 : index
    %c0_4 = arith.constant 0 : index
    %c0_5 = arith.constant 0 : index
    %2 = vector.load %arg1[%c0_3, %c0_4, %c0_5] : memref<3x128x128xbf16, #tpu.memory_space<vmem>>, vector<1x128x128xbf16>
    %3 = vector.shape_cast %2 : vector<1x128x128xbf16> to vector<128x128xbf16>
    %cst = arith.constant dense<0.000000e+00> : vector<8x128xf32>
    %4 = tpu.matmul %0, %3, %cst {dimension_numbers = #tpu.dot_dimension_numbers<[1], [0], [0], [1], [0, 0, 1, 1], [], []>} : vector<8x128xbf16>, vector<128x128xbf16>, vector<8x128xf32> -> vector<8x128xf32>
    %cst_6 = arith.constant dense<0.000000e+00> : vector<128xf32>
    %5 = vector.multi_reduction <add>, %4, %cst_6 [0] : vector<8x128xf32> to vector<128xf32>
    %6 = vector.shape_cast %5 : vector<128xf32> to vector<1x128xf32>
    %7 = arith.mulf %4, %4 : vector<8x128xf32>
    %cst_7 = arith.constant dense<0.000000e+00> : vector<128xf32>
    %8 = vector.multi_reduction <add>, %7, %cst_7 [0] : vector<8x128xf32> to vector<128xf32>
    %9 = vector.shape_cast %8 : vector<128xf32> to vector<1x128xf32>
    %cst_8 = arith.constant 1.250000e-01 : f32
    %10 = vector.broadcast %cst_8 : f32 to vector<1x128xf32>
    %11 = arith.mulf %6, %10 : vector<1x128xf32>
    %cst_9 = arith.constant 1.250000e-01 : f32
    %12 = vector.broadcast %cst_9 : f32 to vector<1x128xf32>
    %13 = arith.mulf %9, %12 : vector<1x128xf32>
    %14 = arith.mulf %11, %11 : vector<1x128xf32>
    %15 = arith.subf %13, %14 : vector<1x128xf32>
    %cst_10 = arith.constant 0.000000e+00 : f32
    %16 = vector.broadcast %cst_10 : f32 to vector<1x128xf32>
    %17 = arith.maximumf %15, %16 : vector<1x128xf32>
    %18 = vector.extract_strided_slice %1 {offsets = [0, 0], sizes = [1, 128], strides = [1, 1]} : vector<5x128xf32> to vector<1x128xf32>
    %19 = vector.extract_strided_slice %1 {offsets = [1, 0], sizes = [1, 128], strides = [1, 1]} : vector<5x128xf32> to vector<1x128xf32>
    %cst_11 = arith.constant 9.99999974E-6 : f32
    %20 = vector.broadcast %cst_11 : f32 to vector<1x128xf32>
    %21 = arith.addf %17, %20 : vector<1x128xf32>
    %22 = math.rsqrt %21 : vector<1x128xf32>
    %23 = arith.mulf %18, %22 : vector<1x128xf32>
    %24 = vector.broadcast %11 : vector<1x128xf32> to vector<8x128xf32>
    %25 = arith.subf %4, %24 : vector<8x128xf32>
    %26 = vector.broadcast %23 : vector<1x128xf32> to vector<8x128xf32>
    %27 = arith.mulf %25, %26 : vector<8x128xf32>
    %28 = vector.broadcast %19 : vector<1x128xf32> to vector<8x128xf32>
    %29 = arith.addf %27, %28 : vector<8x128xf32>
    %cst_12 = arith.constant 0.000000e+00 : f32
    %30 = vector.broadcast %cst_12 : f32 to vector<8x128xf32>
    %31 = arith.maximumf %29, %30 : vector<8x128xf32>
    %32 = arith.truncf %31 : vector<8x128xf32> to vector<8x128xbf16>
    %c1 = arith.constant 1 : index
    %c0_13 = arith.constant 0 : index
    %c0_14 = arith.constant 0 : index
    %33 = vector.load %arg1[%c1, %c0_13, %c0_14] : memref<3x128x128xbf16, #tpu.memory_space<vmem>>, vector<1x128x128xbf16>
    %34 = vector.shape_cast %33 : vector<1x128x128xbf16> to vector<128x128xbf16>
    %cst_15 = arith.constant dense<0.000000e+00> : vector<8x128xf32>
    %35 = tpu.matmul %32, %34, %cst_15 {dimension_numbers = #tpu.dot_dimension_numbers<[1], [0], [0], [1], [0, 0, 1, 1], [], []>} : vector<8x128xbf16>, vector<128x128xbf16>, vector<8x128xf32> -> vector<8x128xf32>
    %cst_16 = arith.constant dense<0.000000e+00> : vector<128xf32>
    %36 = vector.multi_reduction <add>, %35, %cst_16 [0] : vector<8x128xf32> to vector<128xf32>
    %37 = vector.shape_cast %36 : vector<128xf32> to vector<1x128xf32>
    %38 = arith.mulf %35, %35 : vector<8x128xf32>
    %cst_17 = arith.constant dense<0.000000e+00> : vector<128xf32>
    %39 = vector.multi_reduction <add>, %38, %cst_17 [0] : vector<8x128xf32> to vector<128xf32>
    %40 = vector.shape_cast %39 : vector<128xf32> to vector<1x128xf32>
    %cst_18 = arith.constant 1.250000e-01 : f32
    %41 = vector.broadcast %cst_18 : f32 to vector<1x128xf32>
    %42 = arith.mulf %37, %41 : vector<1x128xf32>
    %cst_19 = arith.constant 1.250000e-01 : f32
    %43 = vector.broadcast %cst_19 : f32 to vector<1x128xf32>
    %44 = arith.mulf %40, %43 : vector<1x128xf32>
    %45 = arith.mulf %42, %42 : vector<1x128xf32>
    %46 = arith.subf %44, %45 : vector<1x128xf32>
    %cst_20 = arith.constant 0.000000e+00 : f32
    %47 = vector.broadcast %cst_20 : f32 to vector<1x128xf32>
    %48 = arith.maximumf %46, %47 : vector<1x128xf32>
    %49 = vector.extract_strided_slice %1 {offsets = [2, 0], sizes = [1, 128], strides = [1, 1]} : vector<5x128xf32> to vector<1x128xf32>
    %50 = vector.extract_strided_slice %1 {offsets = [3, 0], sizes = [1, 128], strides = [1, 1]} : vector<5x128xf32> to vector<1x128xf32>
    %cst_21 = arith.constant 9.99999974E-6 : f32
    %51 = vector.broadcast %cst_21 : f32 to vector<1x128xf32>
    %52 = arith.addf %48, %51 : vector<1x128xf32>
    %53 = math.rsqrt %52 : vector<1x128xf32>
    %54 = arith.mulf %49, %53 : vector<1x128xf32>
    %55 = vector.broadcast %42 : vector<1x128xf32> to vector<8x128xf32>
    %56 = arith.subf %35, %55 : vector<8x128xf32>
    %57 = vector.broadcast %54 : vector<1x128xf32> to vector<8x128xf32>
    %58 = arith.mulf %56, %57 : vector<8x128xf32>
    %59 = vector.broadcast %50 : vector<1x128xf32> to vector<8x128xf32>
    %60 = arith.addf %58, %59 : vector<8x128xf32>
    %cst_22 = arith.constant 0.000000e+00 : f32
    %61 = vector.broadcast %cst_22 : f32 to vector<8x128xf32>
    %62 = arith.maximumf %60, %61 : vector<8x128xf32>
    %63 = arith.truncf %62 : vector<8x128xf32> to vector<8x128xbf16>
    %64 = vector.extract_strided_slice %1 {offsets = [4, 0], sizes = [1, 128], strides = [1, 1]} : vector<5x128xf32> to vector<1x128xf32>
    %c2 = arith.constant 2 : index
    %c0_23 = arith.constant 0 : index
    %c0_24 = arith.constant 0 : index
    %65 = vector.load %arg1[%c2, %c0_23, %c0_24] : memref<3x128x128xbf16, #tpu.memory_space<vmem>>, vector<1x128x128xbf16>
    %66 = vector.shape_cast %65 : vector<1x128x128xbf16> to vector<128x128xbf16>
    %cst_25 = arith.constant dense<0.000000e+00> : vector<8x128xf32>
    %67 = tpu.matmul %63, %66, %cst_25 {dimension_numbers = #tpu.dot_dimension_numbers<[1], [0], [0], [1], [0, 0, 1, 1], [], []>} : vector<8x128xbf16>, vector<128x128xbf16>, vector<8x128xf32> -> vector<8x128xf32>
    %68 = vector.broadcast %64 : vector<1x128xf32> to vector<8x128xf32>
    %69 = arith.addf %67, %68 : vector<8x128xf32>
    %c0_26 = arith.constant 0 : index
    %c0_27 = arith.constant 0 : index
    %70 = vector.load %arg3[%c0_26, %c0_27] : memref<8x128xf32, #tpu.memory_space<vmem>>, vector<8x128xf32>
    tpu.vector_store %arg3[%c0_26, %c0_27], %69 {strides = array<i32>} : memref<8x128xf32, #tpu.memory_space<vmem>>, vector<8x128xf32>,
    return
  }
}

</mosaic_0001>

<llo_original>
// kernel: tpu_custom_call.1
$region0: #{tpu_custom_call.1}
  #allocation0 [shape = 'u32[]', space=smem, size = 0x4, offset = 0x4, fixed_abs, tag = 'smem constant byte address 0x4 - core index']
  #allocation1 [shape = 'u32[144,128]{1,0:T(1,128)}', space=vmem, size = 0x12000, scoped, tag = 'internal scratch']
  %s0 = inlined_call_operand.hbm [shape: bf16[8,128], index: 0, kind: input, shape index: {}]
  %s1 = inlined_call_operand.hbm [shape: bf16[3,128,128], index: 1, kind: input, shape index: {}]
  %s2 = inlined_call_operand.hbm [shape: f32[5,128], index: 2, kind: input, shape index: {}]
  %s3 = inlined_call_operand.hbm [shape: f32[8,128], index: 3, kind: output, shape index: {}]
  %s4 = sld [smem:[#allocation0]]
  $region34: #{tpu_custom_call.1} parent=0
    _
  %s6 = ssub.s32 1, %s4
  %s7 = scalar_select 0, %s6, %s4
  $region1: #{tpu_custom_call.1} parent=0
    #allocation2 [shape = 'u8[2048]{0}', space=vmem, size = 0x800, scoped, tag = 'input window, operand 0, single buffered']
    #allocation3 [shape = 's32[1]{0}', space=sflag, size = 0x4, scoped, tag = 'scoped memory for tpu_custom_call.1']
    #allocation4 [shape = 's32[1]{0}', space=sflag, size = 0x4, scoped, tag = 'scoped memory for tpu_custom_call.1']
    #allocation5 [shape = 'u8[98304]{0}', space=vmem, size = 0x18000, scoped, tag = 'input window, operand 1, single buffered']
    #allocation6 [shape = 's32[1]{0}', space=sflag, size = 0x4, scoped, tag = 'scoped memory for tpu_custom_call.1']
    #allocation7 [shape = 'u8[4096]{0}', space=vmem, size = 0x1000, scoped, tag = 'input window, operand 2, single buffered']
    #allocation8 [shape = 'u8[4096]{0}', space=vmem, size = 0x1000, scoped, tag = 'output window, operand 0, single buffered']
    %8 = vsyncpa [#allocation3], 0
    %9 = vsyncpa [#allocation6], 0
    %10 = vsyncpa [#allocation4], 0
    // Predicated region
    $region2: #{tpu_custom_call.1} parent=1 // pred_check
      _
    $region3: #{tpu_custom_call.1} parent=1 // pred_check_branch
      %12 = sbr.rel (0) target = $region5
    $region4: #{tpu_custom_call.1} parent=1 // pred_region
      %s14 = ssub.s32 64, 64
      %15 = vsyncadd [#allocation3], %s14
      %s17 = sshll.u32 [#allocation2], 4
      %s18 = int_to_ptr.vmem [resolvable:$true] %s17
      %20 = dma.hbm_to_vmem [thread:$0]  %s0, 64, %s18, [#allocation3]
    $region5: #{tpu_custom_call.1} parent=1 // pred_fallthru
      _
    // Predicated region
    $region6: #{tpu_custom_call.1} parent=1 // pred_check
      _
    $region7: #{tpu_custom_call.1} parent=1 // pred_check_branch
      %22 = sbr.rel (0) target = $region9
    $region8: #{tpu_custom_call.1} parent=1 // pred_region
      %s24 = ssub.s32 3072, 3072
      %25 = vsyncadd [#allocation6], %s24
      %s26 = sshll.u32 [#allocation5], 4
      %s27 = int_to_ptr.vmem [resolvable:$true] %s26
      %32 = dma.hbm_to_vmem [thread:$0]  %s1, 3072, %s27, [#allocation6], 64, 64, 4
    $region9: #{tpu_custom_call.1} parent=1 // pred_fallthru
      _
    // Predicated region
    $region10: #{tpu_custom_call.1} parent=1 // pred_check
      _
    $region11: #{tpu_custom_call.1} parent=1 // pred_check_branch
      %34 = sbr.rel (0) target = $region13
    $region12: #{tpu_custom_call.1} parent=1 // pred_region
      %s36 = ssub.s32 128, 128
      %37 = vsyncadd [#allocation6], %s36
      %s39 = sshll.u32 [#allocation7], 4
      %s40 = int_to_ptr.vmem [resolvable:$true] %s39
      %42 = dma.hbm_to_vmem [thread:$0]  %s2, 128, %s40, [#allocation6]
    $region13: #{tpu_custom_call.1} parent=1 // pred_fallthru
      _
    // Predicated region
    $region14: #{tpu_custom_call.1} parent=1 // pred_check
      _
    $region15: #{tpu_custom_call.1} parent=1 // pred_check_branch
      %44 = sbr.rel (0) target = $region17
    $region16: #{tpu_custom_call.1} parent=1 // pred_region
      %45 = dma.done [#allocation3], 64
    $region17: #{tpu_custom_call.1} parent=1 // pred_fallthru
      _
    // Predicated region
    $region18: #{tpu_custom_call.1} parent=1 // pred_check
      _
    $region19: #{tpu_custom_call.1} parent=1 // pred_check_branch
      %47 = sbr.rel (0) target = $region21
    $region20: #{tpu_custom_call.1} parent=1 // pred_region
      %48 = dma.done [#allocation6], 3072
    $region21: #{tpu_custom_call.1} parent=1 // pred_fallthru
      _
    // Predicated region
    $region22: #{tpu_custom_call.1} parent=1 // pred_check
      _
    $region23: #{tpu_custom_call.1} parent=1 // pred_check_branch
      %50 = sbr.rel (0) target = $region25
    $region24: #{tpu_custom_call.1} parent=1 // pred_region
      %51 = dma.done [#allocation6], 128
    $region25: #{tpu_custom_call.1} parent=1 // pred_fallthru
      _
    %v53 = vld [vmem:[#allocation2] sm:$0xf]
    %v54 = vld [vmem:[#allocation7] sm:$0x1f]
    %v55 = vld [vmem:[#allocation5] sm:$0xf]
    %v56 = vld [vmem:[#allocation5 + $0x4] sm:$0xf]
    %v57 = vld [vmem:[#allocation5 + $0x8] sm:$0xf]
    %v58 = vld [vmem:[#allocation5 + $0xc] sm:$0xf]
    %v59 = vld [vmem:[#allocation5 + $0x10] sm:$0xf]
    %v60 = vld [vmem:[#allocation5 + $0x14] sm:$0xf]
    %v61 = vld [vmem:[#allocation5 + $0x18] sm:$0xf]
    %v62 = vld [vmem:[#allocation5 + $0x1c] sm:$0xf]
    %v63 = vld [vmem:[#allocation5 + $0x20] sm:$0xf]
    %v64 = vld [vmem:[#allocation5 + $0x24] sm:$0xf]
    %v65 = vld [vmem:[#allocation5 + $0x28] sm:$0xf]
    %v66 = vld [vmem:[#allocation5 + $0x2c] sm:$0xf]
    %v67 = vld [vmem:[#allocation5 + $0x30] sm:$0xf]
    %v68 = vld [vmem:[#allocation5 + $0x34] sm:$0xf]
    %v69 = vld [vmem:[#allocation5 + $0x38] sm:$0xf]
    %v70 = vld [vmem:[#allocation5 + $0x3c] sm:$0xf]
    %v87 = vunpack.c.l.b16 %v55
    %v88 = vunpack.c.l.b16 %v56
    %v89 = vunpack.c.l.b16 %v57
    %v90 = vunpack.c.l.b16 %v58
    %v91 = vunpack.c.l.b16 %v59
    %v92 = vunpack.c.l.b16 %v60
    %v93 = vunpack.c.l.b16 %v61
    %v94 = vunpack.c.l.b16 %v62
    %v95 = vunpack.c.l.b16 %v63
    %v96 = vunpack.c.l.b16 %v64
    %v97 = vunpack.c.l.b16 %v65
    %v98 = vunpack.c.l.b16 %v66
    %v99 = vunpack.c.l.b16 %v67
    %v100 = vunpack.c.l.b16 %v68
    %v101 = vunpack.c.l.b16 %v69
    %v102 = vunpack.c.l.b16 %v70
    %v103 = vpack.c.b16 %v88, %v87
    %v104 = vpack.c.b16 %v90, %v89
    %v105 = vpack.c.b16 %v92, %v91
    %v106 = vpack.c.b16 %v94, %v93
    %v107 = vpack.c.b16 %v96, %v95
    %v108 = vpack.c.b16 %v98, %v97
    %v109 = vpack.c.b16 %v100, %v99
    %v110 = vpack.c.b16 %v102, %v101
    %119 = vmatprep.subr.bf16.mxu0 0
    %120 = vmatpush1.bf16.msra.mxu0 %v103
    %121 = vmatprep.subr.bf16.mxu0 0
    %122 = vmatpush1.bf16.msra.mxu0 %v104
    %123 = vmatprep.subr.bf16.mxu0 0
    %124 = vmatpush1.bf16.msra.mxu0 %v105
    %125 = vmatprep.subr.bf16.mxu0 0
    %126 = vmatpush1.bf16.msra.mxu0 %v106
    %127 = vmatprep.subr.bf16.mxu0 0
    %128 = vmatpush1.bf16.msra.mxu0 %v107
    %129 = vmatprep.subr.bf16.mxu0 0
    %130 = vmatpush1.bf16.msra.mxu0 %v108
    %131 = vmatprep.subr.bf16.mxu0 0
    %132 = vmatpush1.bf16.msra.mxu0 %v109
    %133 = vmatprep.subr.bf16.mxu0 0
    %134 = vmatpush1.bf16.msra.mxu0 %v110
    %135 = vmatprep.subr.bf16.mxu0 0
    %136 = vmatpush1.bf16.msra.mxu0 0
    %137 = vmatprep.subr.bf16.mxu0 0
    %138 = vmatpush1.bf16.msra.mxu0 0
    %139 = vmatprep.subr.bf16.mxu0 0
    %140 = vmatpush1.bf16.msra.mxu0 0
    %141 = vmatprep.subr.bf16.mxu0 0
    %142 = vmatpush1.bf16.msra.mxu0 0
    %143 = vmatprep.subr.bf16.mxu0 0
    %144 = vmatpush1.bf16.msra.mxu0 0
    %145 = vmatprep.subr.bf16.mxu0 0
    %146 = vmatpush1.bf16.msra.mxu0 0
    %147 = vmatprep.subr.bf16.mxu0 0
    %148 = vmatpush1.bf16.msra.mxu0 0
    %149 = vmatprep.subr.bf16.mxu0 0
    %150 = vmatpush1.bf16.msra.mxu0 0
    %151 = vmatprep.mubr.bf16.mxu0 0
    %152 = vmatmul.mubr.bf16.gmra.mrb[0].mxu0 %v53
    %v153 = vpop.f32.mrb[0].mxu0
    %v154 = vadd.f32 0.0, %v153
    %v155 = vpop.f32.mrb[0].mxu0
    %v156 = vpop.f32.mrb[0].mxu0
    %v157 = vpop.f32.mrb[0].mxu0
    %158 = vdwg.mxu0
    %v159 = vrot.slane %v154, 4
    %v160 = vadd.f32 %v154, %v159
    %v161 = vrot.slane %v160, 2
    %v162 = vadd.f32 %v160, %v161
    %v163 = vrot.slane %v162, 1
    %v164 = vadd.f32 %v162, %v163
    %v165 = vmul.f32 %v154, %v154
    %v166 = vrot.slane %v165, 4
    %v167 = vadd.f32 %v165, %v166
    %v168 = vrot.slane %v167, 2
    %v169 = vadd.f32 %v167, %v168
    %v170 = vrot.slane %v169, 1
    %v171 = vadd.f32 %v169, %v170
    %v172 = vmul.f32 %v164, 0.125
    %v173 = vmul.f32 %v171, 0.125
    %v174 = vmul.f32 %v172, %v172
    %v175 = vsub.f32 %v173, %v174
    %v176 = vmax.f32 %v175, 0.0
    %v177 = vadd.f32 %v176, 1e-05
    %v178 = vrsqrt.pop %v177
    %v179 = vmul.f32 %v54, %v178
    %v180 = vsub.f32 %v154, %v172
    %v181 = vlaneseq
    %v182 = vshrl.u32 %v181, 7
    %v183 = vsub.s32 0, %v182
    %v184 = vrot.slane %v179, %v183
    %v185 = vmul.f32 %v180, %v184
    %v186 = vlaneseq
    %v187 = vshrl.u32 %v186, 7
    %v188 = vsub.s32 1, %v187
    %v189 = vrot.slane %v54, %v188
    %v190 = vadd.f32 %v185, %v189
    %v191 = vmax.f32 %v190, 0.0
    %v192 = vpack.c.bf16 %v191, %v191
    %s193 = scalar_lea.vmem [#allocation5], 64
    %v194 = vld [vmem:[%s193] sm:$0xf]
    %v195 = vld [vmem:[%s193 + $0x4] sm:$0xf]
    %v196 = vld [vmem:[%s193 + $0x8] sm:$0xf]
    %v197 = vld [vmem:[%s193 + $0xc] sm:$0xf]
    %v198 = vld [vmem:[%s193 + $0x10] sm:$0xf]
    %v199 = vld [vmem:[%s193 + $0x14] sm:$0xf]
    %v200 = vld [vmem:[%s193 + $0x18] sm:$0xf]
    %v201 = vld [vmem:[%s193 + $0x1c] sm:$0xf]
    %v202 = vld [vmem:[%s193 + $0x20] sm:$0xf]
    %v203 = vld [vmem:[%s193 + $0x24] sm:$0xf]
    %v204 = vld [vmem:[%s193 + $0x28] sm:$0xf]
    %v205 = vld [vmem:[%s193 + $0x2c] sm:$0xf]
    %v206 = vld [vmem:[%s193 + $0x30] sm:$0xf]
    %v207 = vld [vmem:[%s193 + $0x34] sm:$0xf]
    %v208 = vld [vmem:[%s193 + $0x38] sm:$0xf]
    %v209 = vld [vmem:[%s193 + $0x3c] sm:$0xf]
    %v226 = vunpack.c.l.b16 %v194
    %v227 = vunpack.c.l.b16 %v195
    %v228 = vunpack.c.l.b16 %v196
    %v229 = vunpack.c.l.b16 %v197
    %v230 = vunpack.c.l.b16 %v198
    %v231 = vunpack.c.l.b16 %v199
    %v232 = vunpack.c.l.b16 %v200
    %v233 = vunpack.c.l.b16 %v201
    %v234 = vunpack.c.l.b16 %v202
    %v235 = vunpack.c.l.b16 %v203
    %v236 = vunpack.c.l.b16 %v204
    %v237 = vunpack.c.l.b16 %v205
    %v238 = vunpack.c.l.b16 %v206
    %v239 = vunpack.c.l.b16 %v207
    %v240 = vunpack.c.l.b16 %v208
    %v241 = vunpack.c.l.b16 %v209
    %v242 = vpack.c.b16 %v227, %v226
    %v243 = vpack.c.b16 %v229, %v228
    %v244 = vpack.c.b16 %v231, %v230
    %v245 = vpack.c.b16 %v233, %v232
    %v246 = vpack.c.b16 %v235, %v234
    %v247 = vpack.c.b16 %v237, %v236
    %v248 = vpack.c.b16 %v239, %v238
    %v249 = vpack.c.b16 %v241, %v240
    %258 = vmatprep.subr.bf16.mxu0 0
    %259 = vmatpush1.bf16.msra.mxu0 %v242
    %260 = vmatprep.subr.bf16.mxu0 0
    %261 = vmatpush1.bf16.msra.mxu0 %v243
    %262 = vmatprep.subr.bf16.mxu0 0
    %263 = vmatpush1.bf16.msra.mxu0 %v244
    %264 = vmatprep.subr.bf16.mxu0 0
    %265 = vmatpush1.bf16.msra.mxu0 %v245
    %266 = vmatprep.subr.bf16.mxu0 0
    %267 = vmatpush1.bf16.msra.mxu0 %v246
    %268 = vmatprep.subr.bf16.mxu0 0
    %269 = vmatpush1.bf16.msra.mxu0 %v247
    %270 = vmatprep.subr.bf16.mxu0 0
    %271 = vmatpush1.bf16.msra.mxu0 %v248
    %272 = vmatprep.subr.bf16.mxu0 0
    %273 = vmatpush1.bf16.msra.mxu0 %v249
    %274 = vmatprep.subr.bf16.mxu0 0
    %275 = vmatpush1.bf16.msra.mxu0 0
    %276 = vmatprep.subr.bf16.mxu0 0
    %277 = vmatpush1.bf16.msra.mxu0 0
    %278 = vmatprep.subr.bf16.mxu0 0
    %279 = vmatpush1.bf16.msra.mxu0 0
    %280 = vmatprep.subr.bf16.mxu0 0
    %281 = vmatpush1.bf16.msra.mxu0 0
    %282 = vmatprep.subr.bf16.mxu0 0
    %283 = vmatpush1.bf16.msra.mxu0 0
    %284 = vmatprep.subr.bf16.mxu0 0
    %285 = vmatpush1.bf16.msra.mxu0 0
    %286 = vmatprep.subr.bf16.mxu0 0
    %287 = vmatpush1.bf16.msra.mxu0 0
    %288 = vmatprep.subr.bf16.mxu0 0
    %289 = vmatpush1.bf16.msra.mxu0 0
    %290 = vmatprep.mubr.bf16.mxu0 0
    %291 = vmatmul.mubr.bf16.gmra.mrb[0].mxu0 %v192
    %v292 = vpop.f32.mrb[0].mxu0
    %v293 = vadd.f32 0.0, %v292
    %v294 = vpop.f32.mrb[0].mxu0
    %v295 = vpop.f32.mrb[0].mxu0
    %v296 = vpop.f32.mrb[0].mxu0
    %297 = vdwg.mxu0
    %v298 = vrot.slane %v293, 4
    %v299 = vadd.f32 %v293, %v298
    %v300 = vrot.slane %v299, 2
    %v301 = vadd.f32 %v299, %v300
    %v302 = vrot.slane %v301, 1
    %v303 = vadd.f32 %v301, %v302
    %v304 = vmul.f32 %v293, %v293
    %v305 = vrot.slane %v304, 4
    %v306 = vadd.f32 %v304, %v305
    %v307 = vrot.slane %v306, 2
    %v308 = vadd.f32 %v306, %v307
    %v309 = vrot.slane %v308, 1
    %v310 = vadd.f32 %v308, %v309
    %v311 = vmul.f32 %v303, 0.125
    %v312 = vmul.f32 %v310, 0.125
    %v313 = vmul.f32 %v311, %v311
    %v314 = vsub.f32 %v312, %v313
    %v315 = vmax.f32 %v314, 0.0
    %v316 = vadd.f32 %v315, 1e-05
    %v317 = vrsqrt.pop %v316
    %v318 = vmul.f32 %v54, %v317
    %v319 = vsub.f32 %v293, %v311
    %v320 = vlaneseq
    %v321 = vshrl.u32 %v320, 7
    %v322 = vsub.s32 2, %v321
    %v323 = vrot.slane %v318, %v322
    %v324 = vmul.f32 %v319, %v323
    %v325 = vlaneseq
    %v326 = vshrl.u32 %v325, 7
    %v327 = vsub.s32 3, %v326
    %v328 = vrot.slane %v54, %v327
    %v329 = vadd.f32 %v324, %v328
    %v330 = vmax.f32 %v329, 0.0
    %v331 = vpack.c.bf16 %v330, %v330
    %s332 = scalar_lea.vmem [#allocation5], 128
    %v333 = vld [vmem:[%s332] sm:$0xf]
    %v334 = vld [vmem:[%s332 + $0x4] sm:$0xf]
    %v335 = vld [vmem:[%s332 + $0x8] sm:$0xf]
    %v336 = vld [vmem:[%s332 + $0xc] sm:$0xf]
    %v337 = vld [vmem:[%s332 + $0x10] sm:$0xf]
    %v338 = vld [vmem:[%s332 + $0x14] sm:$0xf]
    %v339 = vld [vmem:[%s332 + $0x18] sm:$0xf]
    %v340 = vld [vmem:[%s332 + $0x1c] sm:$0xf]
    %v341 = vld [vmem:[%s332 + $0x20] sm:$0xf]
    %v342 = vld [vmem:[%s332 + $0x24] sm:$0xf]
    %v343 = vld [vmem:[%s332 + $0x28] sm:$0xf]
    %v344 = vld [vmem:[%s332 + $0x2c] sm:$0xf]
    %v345 = vld [vmem:[%s332 + $0x30] sm:$0xf]
    %v346 = vld [vmem:[%s332 + $0x34] sm:$0xf]
    %v347 = vld [vmem:[%s332 + $0x38] sm:$0xf]
    %v348 = vld [vmem:[%s332 + $0x3c] sm:$0xf]
    %v349 = vlaneseq
    %v350 = vshrl.u32 %v349, 7
    %v351 = vsub.s32 4, %v350
    %v352 = vrot.slane %v54, %v351
    %v369 = vunpack.c.l.b16 %v333
    %v370 = vunpack.c.l.b16 %v334
    %v371 = vunpack.c.l.b16 %v335
    %v372 = vunpack.c.l.b16 %v336
    %v373 = vunpack.c.l.b16 %v337
    %v374 = vunpack.c.l.b16 %v338
    %v375 = vunpack.c.l.b16 %v339
    %v376 = vunpack.c.l.b16 %v340
    %v377 = vunpack.c.l.b16 %v341
    %v378 = vunpack.c.l.b16 %v342
    %v379 = vunpack.c.l.b16 %v343
    %v380 = vunpack.c.l.b16 %v344
    %v381 = vunpack.c.l.b16 %v345
    %v382 = vunpack.c.l.b16 %v346
    %v383 = vunpack.c.l.b16 %v347
    %v384 = vunpack.c.l.b16 %v348
    %v385 = vpack.c.b16 %v370, %v369
    %v386 = vpack.c.b16 %v372, %v371
    %v387 = vpack.c.b16 %v374, %v373
    %v388 = vpack.c.b16 %v376, %v375
    %v389 = vpack.c.b16 %v378, %v377
    %v390 = vpack.c.b16 %v380, %v379
    %v391 = vpack.c.b16 %v382, %v381
    %v392 = vpack.c.b16 %v384, %v383
    %401 = vmatprep.subr.bf16.mxu0 0
    %402 = vmatpush1.bf16.msra.mxu0 %v385
    %403 = vmatprep.subr.bf16.mxu0 0
    %404 = vmatpush1.bf16.msra.mxu0 %v386
    %405 = vmatprep.subr.bf16.mxu0 0
    %406 = vmatpush1.bf16.msra.mxu0 %v387
    %407 = vmatprep.subr.bf16.mxu0 0
    %408 = vmatpush1.bf16.msra.mxu0 %v388
    %409 = vmatprep.subr.bf16.mxu0 0
    %410 = vmatpush1.bf16.msra.mxu0 %v389
    %411 = vmatprep.subr.bf16.mxu0 0
    %412 = vmatpush1.bf16.msra.mxu0 %v390
    %413 = vmatprep.subr.bf16.mxu0 0
    %414 = vmatpush1.bf16.msra.mxu0 %v391
    %415 = vmatprep.subr.bf16.mxu0 0
    %416 = vmatpush1.bf16.msra.mxu0 %v392
    %417 = vmatprep.subr.bf16.mxu0 0
    %418 = vmatpush1.bf16.msra.mxu0 0
    %419 = vmatprep.subr.bf16.mxu0 0
    %420 = vmatpush1.bf16.msra.mxu0 0
    %421 = vmatprep.subr.bf16.mxu0 0
    %422 = vmatpush1.bf16.msra.mxu0 0
    %423 = vmatprep.subr.bf16.mxu0 0
    %424 = vmatpush1.bf16.msra.mxu0 0
    %425 = vmatprep.subr.bf16.mxu0 0
    %426 = vmatpush1.bf16.msra.mxu0 0
    %427 = vmatprep.subr.bf16.mxu0 0
    %428 = vmatpush1.bf16.msra.mxu0 0
    %429 = vmatprep.subr.bf16.mxu0 0
    %430 = vmatpush1.bf16.msra.mxu0 0
    %431 = vmatprep.subr.bf16.mxu0 0
    %432 = vmatpush1.bf16.msra.mxu0 0
    %433 = vmatprep.mubr.bf16.mxu0 0
    %434 = vmatmul.mubr.bf16.gmra.mrb[0].mxu0 %v331
    %v435 = vpop.f32.mrb[0].mxu0
    %v436 = vadd.f32 %v352, %v435
    %v437 = vpop.f32.mrb[0].mxu0
    %v438 = vpop.f32.mrb[0].mxu0
    %v439 = vpop.f32.mrb[0].mxu0
    %440 = vdwg.mxu0
    %441 = vst [vmem:[#allocation8] sm:$0xff] %v436
    // Predicated region
    $region26: #{tpu_custom_call.1} parent=1 // pred_check
      _
    $region27: #{tpu_custom_call.1} parent=1 // pred_check_branch
      %443 = sbr.rel (0) target = $region29
    $region28: #{tpu_custom_call.1} parent=1 // pred_region
      %s445 = ssub.s32 128, 128
      %446 = vsyncadd [#allocation4], %s445
      %s448 = sshll.u32 [#allocation8], 4
      %s449 = int_to_ptr.vmem [resolvable:$true] %s448
      %451 = dma.vmem_to_hbm [thread:$0]  %s449, 128, %s3, [#allocation4]
    $region29: #{tpu_custom_call.1} parent=1 // pred_fallthru
      _
    // Predicated region
    $region30: #{tpu_custom_call.1} parent=1 // pred_check
      _
    $region31: #{tpu_custom_call.1} parent=1 // pred_check_branch
      %453 = sbr.rel (0) target = $region33
    $region32: #{tpu_custom_call.1} parent=1 // pred_region
      %454 = dma.done [#allocation4], 128
    $region33: #{tpu_custom_call.1} parent=1 // pred_fallthru
      _
    %455 = vsyncpa [#allocation3], 1
    %456 = vsyncpa [#allocation6], 1
    %457 = vsyncpa [#allocation4], 1

</llo_original>
